<compile_context>
chip_gen: v5e
topology: v5e:2x2
jax: 0.10.0
libtpu: 0.0.40
codegen_flags: <defaults>
</compile_context>

<pallas_src>
import functools

import jax
import jax.numpy as jnp
from jax.experimental import pallas as pl
from jax.experimental.pallas import tpu as pltpu


_LEAK = 0.01  # ExpUnit: (1 - 0.01) * clip(u, 0, max_value) + 0.01 * u


def _exp_unit_activation(u, relu_max):
    return (1.0 - _LEAK) * jnp.clip(u, 0.0, relu_max) + _LEAK * u


def _round_up(x, m):
    return ((x + m - 1) // m) * m


# -----------------------------------------------------------------------------
# Kernel: one batch tile of the entire fused network.
# refs = (x,
#         w0, b0, ..., w_{n_hidden-1}, b_{n_hidden-1},   # trunk ExpUnit layers
#         wf, bf,                                        # trunk FCLayer
#         ws0, bs0, ws1, bs1, ws2, bs2,                  # fused side nets
#         o)
# Every weight matrix is already exponentiated / block-structured by the wrapper.
# -----------------------------------------------------------------------------
def _smnn_plus_kernel(*refs, n_hidden, relu_max):
    x_ref = refs[0]
    o_ref = refs[-1]
    wb = refs[1:-1]
    f32 = jnp.float32

    def affine(h, w_ref, b_ref):
        return jnp.dot(h, w_ref[...], preferred_element_type=f32) + b_ref[...]

    h = x_ref[...].astype(f32)
    idx = 0
    for _ in range(n_hidden):                                            # trunk ExpUnits
        h = _exp_unit_activation(affine(h, wb[idx], wb[idx + 1]), relu_max)
        idx += 2
    main = affine(h, wb[idx], wb[idx + 1])                               # trunk FCLayer
    idx += 2
    t = _exp_unit_activation(affine(h, wb[idx], wb[idx + 1]), relu_max)  # side L0 (scattered)
    idx += 2
    t = _exp_unit_activation(affine(t, wb[idx], wb[idx + 1]), relu_max)  # side L1 (block-diag)
    idx += 2
    side = affine(t, wb[idx], wb[idx + 1])                               # side FC (block-diag)
    o_ref[...] = (main + side).astype(o_ref.dtype)


# -----------------------------------------------------------------------------
# Wrapper-side weight preparation (done once per call, outside the grid loop).
# -----------------------------------------------------------------------------
def _block_diag(blocks):
    rows = sum(b.shape[0] for b in blocks)
    cols = sum(b.shape[1] for b in blocks)
    out = jnp.zeros((rows, cols), jnp.float32)
    r = c = 0
    for b in blocks:
        out = out.at[r:r + b.shape[0], c:c + b.shape[1]].set(b.astype(jnp.float32))
        r += b.shape[0]
        c += b.shape[1]
    return out


def _build_effective_mats(params):
    """exp() the weights once and fold the per-output side nets into scattered /
    block-diagonal matrices. Returns the flat [W, b_row, ...] list the kernel expects."""
    mats = []
    for w, b in params["hidden"]:
        mats += [jnp.exp(w).astype(jnp.float32), b.reshape(1, -1).astype(jnp.float32)]
    wf, bf = params["fc"]
    mats += [jnp.exp(wf).astype(jnp.float32), bf.reshape(1, -1).astype(jnp.float32)]

    side = params["side"]
    n_out = len(side)
    h_last = params["hidden"][-1][0].shape[1]
    s0 = side[0][0][0].shape[1]

    # Side layer 0: place exp(W0_i) (3 x s0) at rows i..i+2, cols [i*s0, (i+1)*s0) so a
    # single dense matmul computes every h[:, i:i+3] @ exp(W0_i) at once.
    ws0 = jnp.zeros((h_last, n_out * s0), jnp.float32)
    for i, layers in enumerate(side):
        w0, _ = layers[0]
        ws0 = ws0.at[i:i + 3, i * s0:(i + 1) * s0].set(jnp.exp(w0).astype(jnp.float32))
    bs0 = jnp.concatenate([l[0][1].reshape(1, -1) for l in side], axis=1).astype(jnp.float32)
    ws1 = _block_diag([jnp.exp(l[1][0]) for l in side])
    bs1 = jnp.concatenate([l[1][1].reshape(1, -1) for l in side], axis=1).astype(jnp.float32)
    ws2 = _block_diag([jnp.exp(l[2][0]) for l in side])
    bs2 = jnp.concatenate([l[2][1].reshape(1, -1) for l in side], axis=1).astype(jnp.float32)
    mats += [ws0, bs0, ws1, bs1, ws2, bs2]
    return mats


def pure_monotonic_plus_forward(x, params, *, relu_max=1.0, tile_b=256):
    """x: [B, input_size] -> [B, output_size]."""
    B, in_features = x.shape
    n_hidden = len(params["hidden"])
    h_last = params["hidden"][-1][0].shape[1]
    n_out = params["fc"][0].shape[1]
    assert len(params["side"]) == n_out
    assert h_last >= n_out + 2, "side-net slice h[:, i:i+3] must stay in range"

    mats = _build_effective_mats(params)

    # Zero-pad the (odd-width) input feature axis to a sublane multiple; exact math.
    in_pad = _round_up(in_features, 8)
    if in_pad != in_features:
        x = jnp.pad(x, ((0, 0), (0, in_pad - in_features)))
        mats[0] = jnp.pad(mats[0], ((0, in_pad - in_features), (0, 0)))

    tb = min(tile_b, _round_up(B, 8))
    grid = (pl.cdiv(B, tb),)

    x_spec = pl.BlockSpec((tb, in_pad), lambda i: (i, 0))
    w_specs = [pl.BlockSpec(m.shape, lambda i: (0, 0)) for m in mats]  # VMEM-resident
    out_spec = pl.BlockSpec((tb, n_out), lambda i: (i, 0))

    flops = 2 * B * sum(int(mats[k].shape[0] * mats[k].shape[1])
                        for k in range(0, len(mats), 2))
    bytes_accessed = int(x.size * x.dtype.itemsize
                         + sum(int(m.size) * m.dtype.itemsize for m in mats)
                         + B * n_out * x.dtype.itemsize)

    kernel = functools.partial(_smnn_plus_kernel,
                               n_hidden=n_hidden, relu_max=float(relu_max))

    return pl.pallas_call(
        kernel,
        out_shape=jax.ShapeDtypeStruct((B, n_out), x.dtype),
        grid_spec=pltpu.PrefetchScalarGridSpec(
            num_scalar_prefetch=0,
            grid=grid,
            in_specs=[x_spec] + w_specs,
            out_specs=out_spec,
        ),
        compiler_params=pltpu.CompilerParams(
            dimension_semantics=("parallel",),
            vmem_limit_bytes=32 * 1024 * 1024,
        ),
        cost_estimate=pl.CostEstimate(
            flops=int(flops), transcendentals=0, bytes_accessed=bytes_accessed),
    )(x, *mats)


# -----------------------------------------------------------------------------
# Pure-JAX reference (mirrors the torch forward, batched).
# -----------------------------------------------------------------------------
def pure_monotonic_plus_ref(x, params, relu_max=1.0):
    h = x.astype(jnp.float32)
    for w, b in params["hidden"]:
        h = _exp_unit_activation(h @ jnp.exp(w) + b, relu_max)
    wf, bf = params["fc"]
    main = h @ jnp.exp(wf) + bf
    sides = []
    for i, layers in enumerate(params["side"]):
        (w0, b0), (w1, b1), (w2, b2) = layers
        s = h[:, i:i + 3]
        s = _exp_unit_activation(s @ jnp.exp(w0) + b0, relu_max)
        s = _exp_unit_activation(s @ jnp.exp(w1) + b1, relu_max)
        s = s @ jnp.exp(w2) + b2
        sides.append(s)
    return (main + jnp.concatenate(sides, axis=1)).astype(x.dtype)


def init_params(key, input_size, output_size, hidden_sizes, side_net_sizes,
                dtype=jnp.float32):
    def uni(k, shape):
        # torch.nn.init.uniform_(weight, a=-3.0, b=0.0)
        return jax.random.uniform(k, shape, dtype=dtype, minval=-3.0, maxval=0.0)

    def small(k, shape):
        # torch init is zeros; small random values here so the bias path is exercised.
        return jax.random.uniform(k, shape, dtype=dtype, minval=-0.1, maxval=0.1)

    params = {"hidden": [], "fc": None, "side": []}
    dims = [input_size] + list(hidden_sizes)
    for i in range(len(hidden_sizes)):
        key, kw, kb = jax.random.split(key, 3)
        params["hidden"].append((uni(kw, (dims[i], dims[i + 1])),
                                 small(kb, (dims[i + 1],))))
    key, kw, kb = jax.random.split(key, 3)
    params["fc"] = (uni(kw, (hidden_sizes[-1], output_size)),
                    small(kb, (output_size,)))
    sdims = [3, side_net_sizes[0], side_net_sizes[1], 1]
    for _ in range(output_size):
        layers = []
        for j in range(3):
            key, kw, kb = jax.random.split(key, 3)
            layers.append((uni(kw, (sdims[j], sdims[j + 1])),
                           small(kb, (sdims[j + 1],))))
        params["side"].append(layers)
    return params


if __name__ == "__main__":
    key = jax.random.PRNGKey(0)
    k_p, k_x = jax.random.split(key)

    n_groups = 3
    input_size = 3 * n_groups       # 9
    output_size = n_groups + 1      # 4
    hidden_sizes = (64, 64)
    side_net_sizes = (8, 8)
    relu_max = 1.0
    batch = 8

    params = init_params(k_p, input_size, output_size, hidden_sizes, side_net_sizes)
    x = jax.random.normal(k_x, (batch, input_size), dtype=jnp.float32)

    out = pure_monotonic_plus_forward(x, params, relu_max=relu_max)
    out = jax.block_until_ready(out)

    ref = pure_monotonic_plus_ref(x, params, relu_max=relu_max)
    assert out.shape == (batch, output_size)
    assert jnp.allclose(out, ref, atol=1e-4, rtol=1e-4), "mismatch vs reference"

    print("KERNEL_OK")
</pallas_src>

<mosaic_0001>
module attributes {stable_mosaic.version = 11 : i64} {
  func.func @_smnn_plus_kernel(%arg0: i32, %arg1: memref<8x16xf32, #tpu.memory_space<vmem>>, %arg2: memref<16x64xf32, #tpu.memory_space<vmem>>, %arg3: memref<1x64xf32, #tpu.memory_space<vmem>>, %arg4: memref<64x64xf32, #tpu.memory_space<vmem>>, %arg5: memref<1x64xf32, #tpu.memory_space<vmem>>, %arg6: memref<64x4xf32, #tpu.memory_space<vmem>>, %arg7: memref<1x4xf32, #tpu.memory_space<vmem>>, %arg8: memref<64x32xf32, #tpu.memory_space<vmem>>, %arg9: memref<1x32xf32, #tpu.memory_space<vmem>>, %arg10: memref<32x32xf32, #tpu.memory_space<vmem>>, %arg11: memref<1x32xf32, #tpu.memory_space<vmem>>, %arg12: memref<32x4xf32, #tpu.memory_space<vmem>>, %arg13: memref<1x4xf32, #tpu.memory_space<vmem>>, %arg14: memref<8x4xf32, #tpu.memory_space<vmem>>) attributes {dimension_semantics = [#tpu.dimension_semantics<parallel>], iteration_bounds = array<i64: 1>, scalar_prefetch = 0 : i64, scratch_operands = 0 : i64, tpu.core_type = #tpu.core_type<tc>, window_params = [{transform_indices = @transform_0, window_bounds = array<i64: 8, 16>}, {pipeline_mode = #tpu.pipeline_mode<synchronous>, transform_indices = @transform_1, window_bounds = array<i64: 16, 64>}, {pipeline_mode = #tpu.pipeline_mode<synchronous>, transform_indices = @transform_2, window_bounds = array<i64: 1, 64>}, {pipeline_mode = #tpu.pipeline_mode<synchronous>, transform_indices = @transform_3, window_bounds = array<i64: 64, 64>}, {pipeline_mode = #tpu.pipeline_mode<synchronous>, transform_indices = @transform_4, window_bounds = array<i64: 1, 64>}, {pipeline_mode = #tpu.pipeline_mode<synchronous>, transform_indices = @transform_5, window_bounds = array<i64: 64, 4>}, {pipeline_mode = #tpu.pipeline_mode<synchronous>, transform_indices = @transform_6, window_bounds = array<i64: 1, 4>}, {pipeline_mode = #tpu.pipeline_mode<synchronous>, transform_indices = @transform_7, window_bounds = array<i64: 64, 32>}, {pipeline_mode = #tpu.pipeline_mode<synchronous>, transform_indices = @transform_8, window_bounds = array<i64: 1, 32>}, {pipeline_mode = #tpu.pipeline_mode<synchronous>, transform_indices = @transform_9, window_bounds = array<i64: 32, 32>}, {pipeline_mode = #tpu.pipeline_mode<synchronous>, transform_indices = @transform_10, window_bounds = array<i64: 1, 32>}, {pipeline_mode = #tpu.pipeline_mode<synchronous>, transform_indices = @transform_11, window_bounds = array<i64: 32, 4>}, {pipeline_mode = #tpu.pipeline_mode<synchronous>, transform_indices = @transform_12, window_bounds = array<i64: 1, 4>}, {transform_indices = @transform_13, window_bounds = array<i64: 8, 4>}]} {
    %c0 = arith.constant 0 : index
    %c0_0 = arith.constant 0 : index
    %0 = vector.load %arg1[%c0, %c0_0] : memref<8x16xf32, #tpu.memory_space<vmem>>, vector<8x16xf32>
    %c0_1 = arith.constant 0 : index
    %c0_2 = arith.constant 0 : index
    %1 = vector.load %arg2[%c0_1, %c0_2] : memref<16x64xf32, #tpu.memory_space<vmem>>, vector<16x64xf32>
    %cst = arith.constant dense<0.000000e+00> : vector<8x64xf32>
    %2 = tpu.matmul %0, %1, %cst {dimension_numbers = #tpu.dot_dimension_numbers<[1], [0], [0], [1], [0, 0, 1, 1], [], []>} : vector<8x16xf32>, vector<16x64xf32>, vector<8x64xf32> -> vector<8x64xf32>
    %c0_3 = arith.constant 0 : index
    %c0_4 = arith.constant 0 : index
    %3 = vector.load %arg3[%c0_3, %c0_4] : memref<1x64xf32, #tpu.memory_space<vmem>>, vector<1x64xf32>
    %4 = vector.broadcast %3 : vector<1x64xf32> to vector<8x64xf32>
    %5 = arith.addf %2, %4 : vector<8x64xf32>
    %cst_5 = arith.constant 0.000000e+00 : f32
    %cst_6 = arith.constant 1.000000e+00 : f32
    %6 = vector.broadcast %cst_5 : f32 to vector<8x64xf32>
    %7 = arith.maximumf %6, %5 : vector<8x64xf32>
    %8 = vector.broadcast %cst_6 : f32 to vector<8x64xf32>
    %9 = arith.minimumf %8, %7 : vector<8x64xf32>
    %cst_7 = arith.constant 9.900000e-01 : f32
    %10 = vector.broadcast %cst_7 : f32 to vector<8x64xf32>
    %11 = arith.mulf %10, %9 : vector<8x64xf32>
    %cst_8 = arith.constant 0.00999999977 : f32
    %12 = vector.broadcast %cst_8 : f32 to vector<8x64xf32>
    %13 = arith.mulf %12, %5 : vector<8x64xf32>
    %14 = arith.addf %11, %13 : vector<8x64xf32>
    %c0_9 = arith.constant 0 : index
    %c0_10 = arith.constant 0 : index
    %15 = vector.load %arg4[%c0_9, %c0_10] : memref<64x64xf32, #tpu.memory_space<vmem>>, vector<64x64xf32>
    %cst_11 = arith.constant dense<0.000000e+00> : vector<8x64xf32>
    %16 = tpu.matmul %14, %15, %cst_11 {dimension_numbers = #tpu.dot_dimension_numbers<[1], [0], [0], [1], [0, 0, 1, 1], [], []>} : vector<8x64xf32>, vector<64x64xf32>, vector<8x64xf32> -> vector<8x64xf32>
    %c0_12 = arith.constant 0 : index
    %c0_13 = arith.constant 0 : index
    %17 = vector.load %arg5[%c0_12, %c0_13] : memref<1x64xf32, #tpu.memory_space<vmem>>, vector<1x64xf32>
    %18 = vector.broadcast %17 : vector<1x64xf32> to vector<8x64xf32>
    %19 = arith.addf %16, %18 : vector<8x64xf32>
    %cst_14 = arith.constant 0.000000e+00 : f32
    %cst_15 = arith.constant 1.000000e+00 : f32
    %20 = vector.broadcast %cst_14 : f32 to vector<8x64xf32>
    %21 = arith.maximumf %20, %19 : vector<8x64xf32>
    %22 = vector.broadcast %cst_15 : f32 to vector<8x64xf32>
    %23 = arith.minimumf %22, %21 : vector<8x64xf32>
    %cst_16 = arith.constant 9.900000e-01 : f32
    %24 = vector.broadcast %cst_16 : f32 to vector<8x64xf32>
    %25 = arith.mulf %24, %23 : vector<8x64xf32>
    %cst_17 = arith.constant 0.00999999977 : f32
    %26 = vector.broadcast %cst_17 : f32 to vector<8x64xf32>
    %27 = arith.mulf %26, %19 : vector<8x64xf32>
    %28 = arith.addf %25, %27 : vector<8x64xf32>
    %c0_18 = arith.constant 0 : index
    %c0_19 = arith.constant 0 : index
    %29 = vector.load %arg6[%c0_18, %c0_19] : memref<64x4xf32, #tpu.memory_space<vmem>>, vector<64x4xf32>
    %cst_20 = arith.constant dense<0.000000e+00> : vector<8x4xf32>
    %30 = tpu.matmul %28, %29, %cst_20 {dimension_numbers = #tpu.dot_dimension_numbers<[1], [0], [0], [1], [0, 0, 1, 1], [], []>} : vector<8x64xf32>, vector<64x4xf32>, vector<8x4xf32> -> vector<8x4xf32>
    %c0_21 = arith.constant 0 : index
    %c0_22 = arith.constant 0 : index
    %31 = vector.load %arg7[%c0_21, %c0_22] : memref<1x4xf32, #tpu.memory_space<vmem>>, vector<1x4xf32>
    %32 = vector.broadcast %31 : vector<1x4xf32> to vector<8x4xf32>
    %33 = arith.addf %30, %32 : vector<8x4xf32>
    %c0_23 = arith.constant 0 : index
    %c0_24 = arith.constant 0 : index
    %34 = vector.load %arg8[%c0_23, %c0_24] : memref<64x32xf32, #tpu.memory_space<vmem>>, vector<64x32xf32>
    %cst_25 = arith.constant dense<0.000000e+00> : vector<8x32xf32>
    %35 = tpu.matmul %28, %34, %cst_25 {dimension_numbers = #tpu.dot_dimension_numbers<[1], [0], [0], [1], [0, 0, 1, 1], [], []>} : vector<8x64xf32>, vector<64x32xf32>, vector<8x32xf32> -> vector<8x32xf32>
    %c0_26 = arith.constant 0 : index
    %c0_27 = arith.constant 0 : index
    %36 = vector.load %arg9[%c0_26, %c0_27] : memref<1x32xf32, #tpu.memory_space<vmem>>, vector<1x32xf32>
    %37 = vector.broadcast %36 : vector<1x32xf32> to vector<8x32xf32>
    %38 = arith.addf %35, %37 : vector<8x32xf32>
    %cst_28 = arith.constant 0.000000e+00 : f32
    %cst_29 = arith.constant 1.000000e+00 : f32
    %39 = vector.broadcast %cst_28 : f32 to vector<8x32xf32>
    %40 = arith.maximumf %39, %38 : vector<8x32xf32>
    %41 = vector.broadcast %cst_29 : f32 to vector<8x32xf32>
    %42 = arith.minimumf %41, %40 : vector<8x32xf32>
    %cst_30 = arith.constant 9.900000e-01 : f32
    %43 = vector.broadcast %cst_30 : f32 to vector<8x32xf32>
    %44 = arith.mulf %43, %42 : vector<8x32xf32>
    %cst_31 = arith.constant 0.00999999977 : f32
    %45 = vector.broadcast %cst_31 : f32 to vector<8x32xf32>
    %46 = arith.mulf %45, %38 : vector<8x32xf32>
    %47 = arith.addf %44, %46 : vector<8x32xf32>
    %c0_32 = arith.constant 0 : index
    %c0_33 = arith.constant 0 : index
    %48 = vector.load %arg10[%c0_32, %c0_33] : memref<32x32xf32, #tpu.memory_space<vmem>>, vector<32x32xf32>
    %cst_34 = arith.constant dense<0.000000e+00> : vector<8x32xf32>
    %49 = tpu.matmul %47, %48, %cst_34 {dimension_numbers = #tpu.dot_dimension_numbers<[1], [0], [0], [1], [0, 0, 1, 1], [], []>} : vector<8x32xf32>, vector<32x32xf32>, vector<8x32xf32> -> vector<8x32xf32>
    %c0_35 = arith.constant 0 : index
    %c0_36 = arith.constant 0 : index
    %50 = vector.load %arg11[%c0_35, %c0_36] : memref<1x32xf32, #tpu.memory_space<vmem>>, vector<1x32xf32>
    %51 = vector.broadcast %50 : vector<1x32xf32> to vector<8x32xf32>
    %52 = arith.addf %49, %51 : vector<8x32xf32>
    %cst_37 = arith.constant 0.000000e+00 : f32
    %cst_38 = arith.constant 1.000000e+00 : f32
    %53 = vector.broadcast %cst_37 : f32 to vector<8x32xf32>
    %54 = arith.maximumf %53, %52 : vector<8x32xf32>
    %55 = vector.broadcast %cst_38 : f32 to vector<8x32xf32>
    %56 = arith.minimumf %55, %54 : vector<8x32xf32>
    %cst_39 = arith.constant 9.900000e-01 : f32
    %57 = vector.broadcast %cst_39 : f32 to vector<8x32xf32>
    %58 = arith.mulf %57, %56 : vector<8x32xf32>
    %cst_40 = arith.constant 0.00999999977 : f32
    %59 = vector.broadcast %cst_40 : f32 to vector<8x32xf32>
    %60 = arith.mulf %59, %52 : vector<8x32xf32>
    %61 = arith.addf %58, %60 : vector<8x32xf32>
    %c0_41 = arith.constant 0 : index
    %c0_42 = arith.constant 0 : index
    %62 = vector.load %arg12[%c0_41, %c0_42] : memref<32x4xf32, #tpu.memory_space<vmem>>, vector<32x4xf32>
    %cst_43 = arith.constant dense<0.000000e+00> : vector<8x4xf32>
    %63 = tpu.matmul %61, %62, %cst_43 {dimension_numbers = #tpu.dot_dimension_numbers<[1], [0], [0], [1], [0, 0, 1, 1], [], []>} : vector<8x32xf32>, vector<32x4xf32>, vector<8x4xf32> -> vector<8x4xf32>
    %c0_44 = arith.constant 0 : index
    %c0_45 = arith.constant 0 : index
    %64 = vector.load %arg13[%c0_44, %c0_45] : memref<1x4xf32, #tpu.memory_space<vmem>>, vector<1x4xf32>
    %65 = vector.broadcast %64 : vector<1x4xf32> to vector<8x4xf32>
    %66 = arith.addf %63, %65 : vector<8x4xf32>
    %67 = arith.addf %33, %66 : vector<8x4xf32>
    %c0_46 = arith.constant 0 : index
    %c0_47 = arith.constant 0 : index
    %68 = vector.load %arg14[%c0_46, %c0_47] : memref<8x4xf32, #tpu.memory_space<vmem>>, vector<8x4xf32>
    tpu.vector_store %arg14[%c0_46, %c0_47], %67 {strides = array<i32>} : memref<8x4xf32, #tpu.memory_space<vmem>>, vector<8x4xf32>,
    return
  }
  func.func @transform_0(%arg0: i32) -> (i32, i32) {
    %c0_i32 = arith.constant 0 : i32
    %c0_i32_0 = arith.constant 0 : i32
    return %arg0, %c0_i32 : i32, i32
  }
  func.func @transform_1(%arg0: i32) -> (i32, i32) {
    %c0_i32 = arith.constant 0 : i32
    %c0_i32_0 = arith.constant 0 : i32
    %c0_i32_1 = arith.constant 0 : i32
    return %c0_i32, %c0_i32_0 : i32, i32
  }
  func.func @transform_2(%arg0: i32) -> (i32, i32) {
    %c0_i32 = arith.constant 0 : i32
    %c0_i32_0 = arith.constant 0 : i32
    %c0_i32_1 = arith.constant 0 : i32
    return %c0_i32, %c0_i32_0 : i32, i32
  }
  func.func @transform_3(%arg0: i32) -> (i32, i32) {
    %c0_i32 = arith.constant 0 : i32
    %c0_i32_0 = arith.constant 0 : i32
    %c0_i32_1 = arith.constant 0 : i32
    return %c0_i32, %c0_i32_0 : i32, i32
  }
  func.func @transform_4(%arg0: i32) -> (i32, i32) {
    %c0_i32 = arith.constant 0 : i32
    %c0_i32_0 = arith.constant 0 : i32
    %c0_i32_1 = arith.constant 0 : i32
    return %c0_i32, %c0_i32_0 : i32, i32
  }
  func.func @transform_5(%arg0: i32) -> (i32, i32) {
    %c0_i32 = arith.constant 0 : i32
    %c0_i32_0 = arith.constant 0 : i32
    %c0_i32_1 = arith.constant 0 : i32
    return %c0_i32, %c0_i32_0 : i32, i32
  }
  func.func @transform_6(%arg0: i32) -> (i32, i32) {
    %c0_i32 = arith.constant 0 : i32
    %c0_i32_0 = arith.constant 0 : i32
    %c0_i32_1 = arith.constant 0 : i32
    return %c0_i32, %c0_i32_0 : i32, i32
  }
  func.func @transform_7(%arg0: i32) -> (i32, i32) {
    %c0_i32 = arith.constant 0 : i32
    %c0_i32_0 = arith.constant 0 : i32
    %c0_i32_1 = arith.constant 0 : i32
    return %c0_i32, %c0_i32_0 : i32, i32
  }
  func.func @transform_8(%arg0: i32) -> (i32, i32) {
    %c0_i32 = arith.constant 0 : i32
    %c0_i32_0 = arith.constant 0 : i32
    %c0_i32_1 = arith.constant 0 : i32
    return %c0_i32, %c0_i32_0 : i32, i32
  }
  func.func @transform_9(%arg0: i32) -> (i32, i32) {
    %c0_i32 = arith.constant 0 : i32
    %c0_i32_0 = arith.constant 0 : i32
    %c0_i32_1 = arith.constant 0 : i32
    return %c0_i32, %c0_i32_0 : i32, i32
  }
  func.func @transform_10(%arg0: i32) -> (i32, i32) {
    %c0_i32 = arith.constant 0 : i32
    %c0_i32_0 = arith.constant 0 : i32
    %c0_i32_1 = arith.constant 0 : i32
    return %c0_i32, %c0_i32_0 : i32, i32
  }
  func.func @transform_11(%arg0: i32) -> (i32, i32) {
    %c0_i32 = arith.constant 0 : i32
    %c0_i32_0 = arith.constant 0 : i32
    %c0_i32_1 = arith.constant 0 : i32
    return %c0_i32, %c0_i32_0 : i32, i32
  }
  func.func @transform_12(%arg0: i32) -> (i32, i32) {
    %c0_i32 = arith.constant 0 : i32
    %c0_i32_0 = arith.constant 0 : i32
    %c0_i32_1 = arith.constant 0 : i32
    return %c0_i32, %c0_i32_0 : i32, i32
  }
  func.func @transform_13(%arg0: i32) -> (i32, i32) {
    %c0_i32 = arith.constant 0 : i32
    %c0_i32_0 = arith.constant 0 : i32
    return %arg0, %c0_i32 : i32, i32
  }
}

</mosaic_0001>

<llo_original>
// kernel: tpu_custom_call.1
$region0: #{tpu_custom_call.1}
  #allocation0 [shape = 'u32[]', space=smem, size = 0x4, offset = 0x4, fixed_abs, tag = 'smem constant byte address 0x4 - core index']
  #allocation1 [shape = 'u32[72,128]{1,0:T(1,128)}', space=vmem, size = 0x9000, scoped, tag = 'internal scratch']
  %s0 = inlined_call_operand.vmem [shape: f32[8,16], index: 0, kind: input, shape index: {}]
  %s1 = inlined_call_operand.vmem [shape: f32[16,64], index: 1, kind: input, shape index: {}]
  %s2 = inlined_call_operand.vmem [shape: f32[1,64], index: 2, kind: input, shape index: {}]
  %s3 = inlined_call_operand.vmem [shape: f32[64,64], index: 3, kind: input, shape index: {}]
  %s4 = inlined_call_operand.vmem [shape: f32[1,64], index: 4, kind: input, shape index: {}]
  %s5 = inlined_call_operand.vmem [shape: f32[64,4], index: 5, kind: input, shape index: {}]
  %s6 = inlined_call_operand.vmem [shape: f32[1,4], index: 6, kind: input, shape index: {}]
  %s7 = inlined_call_operand.vmem [shape: f32[64,32], index: 7, kind: input, shape index: {}]
  %s8 = inlined_call_operand.vmem [shape: f32[1,32], index: 8, kind: input, shape index: {}]
  %s9 = inlined_call_operand.vmem [shape: f32[32,32], index: 9, kind: input, shape index: {}]
  %s10 = inlined_call_operand.vmem [shape: f32[1,32], index: 10, kind: input, shape index: {}]
  %s11 = inlined_call_operand.vmem [shape: f32[32,4], index: 11, kind: input, shape index: {}]
  %s12 = inlined_call_operand.vmem [shape: f32[1,4], index: 12, kind: input, shape index: {}]
  %s13 = inlined_call_operand.vmem [shape: f32[8,4], index: 13, kind: output, shape index: {}]
  %s14 = sld [smem:[#allocation0]]
  $region62: #{tpu_custom_call.1} parent=0
    _
  %s16 = ssub.s32 1, %s14
  %s17 = scalar_select 0, %s16, %s14
  // Predicated region
  $region2: #{tpu_custom_call.1} parent=0 // pred_check
    _
  $region3: #{tpu_custom_call.1} parent=0 // pred_check_branch
    %19 = sbr.rel (0) target = $region5
  $region4: #{tpu_custom_call.1} parent=0 // pred_region
    _
  $region5: #{tpu_custom_call.1} parent=0 // pred_fallthru
    _
  // Predicated region
  $region6: #{tpu_custom_call.1} parent=0 // pred_check
    _
  $region7: #{tpu_custom_call.1} parent=0 // pred_check_branch
    %21 = sbr.rel (0) target = $region9
  $region8: #{tpu_custom_call.1} parent=0 // pred_region
    _
  $region9: #{tpu_custom_call.1} parent=0 // pred_fallthru
    _
  // Predicated region
  $region10: #{tpu_custom_call.1} parent=0 // pred_check
    _
  $region11: #{tpu_custom_call.1} parent=0 // pred_check_branch
    %23 = sbr.rel (0) target = $region13
  $region12: #{tpu_custom_call.1} parent=0 // pred_region
    _
  $region13: #{tpu_custom_call.1} parent=0 // pred_fallthru
    _
  // Predicated region
  $region14: #{tpu_custom_call.1} parent=0 // pred_check
    _
  $region15: #{tpu_custom_call.1} parent=0 // pred_check_branch
    %25 = sbr.rel (0) target = $region17
  $region16: #{tpu_custom_call.1} parent=0 // pred_region
    _
  $region17: #{tpu_custom_call.1} parent=0 // pred_fallthru
    _
  // Predicated region
  $region18: #{tpu_custom_call.1} parent=0 // pred_check
    _
  $region19: #{tpu_custom_call.1} parent=0 // pred_check_branch
    %27 = sbr.rel (0) target = $region21
  $region20: #{tpu_custom_call.1} parent=0 // pred_region
    _
  $region21: #{tpu_custom_call.1} parent=0 // pred_fallthru
    _
  // Predicated region
  $region22: #{tpu_custom_call.1} parent=0 // pred_check
    _
  $region23: #{tpu_custom_call.1} parent=0 // pred_check_branch
    %29 = sbr.rel (0) target = $region25
  $region24: #{tpu_custom_call.1} parent=0 // pred_region
    _
  $region25: #{tpu_custom_call.1} parent=0 // pred_fallthru
    _
  // Predicated region
  $region26: #{tpu_custom_call.1} parent=0 // pred_check
    _
  $region27: #{tpu_custom_call.1} parent=0 // pred_check_branch
    %31 = sbr.rel (0) target = $region29
  $region28: #{tpu_custom_call.1} parent=0 // pred_region
    _
  $region29: #{tpu_custom_call.1} parent=0 // pred_fallthru
    _
  // Predicated region
  $region30: #{tpu_custom_call.1} parent=0 // pred_check
    _
  $region31: #{tpu_custom_call.1} parent=0 // pred_check_branch
    %33 = sbr.rel (0) target = $region33
  $region32: #{tpu_custom_call.1} parent=0 // pred_region
    _
  $region33: #{tpu_custom_call.1} parent=0 // pred_fallthru
    _
  // Predicated region
  $region34: #{tpu_custom_call.1} parent=0 // pred_check
    _
  $region35: #{tpu_custom_call.1} parent=0 // pred_check_branch
    %35 = sbr.rel (0) target = $region37
  $region36: #{tpu_custom_call.1} parent=0 // pred_region
    _
  $region37: #{tpu_custom_call.1} parent=0 // pred_fallthru
    _
  // Predicated region
  $region38: #{tpu_custom_call.1} parent=0 // pred_check
    _
  $region39: #{tpu_custom_call.1} parent=0 // pred_check_branch
    %37 = sbr.rel (0) target = $region41
  $region40: #{tpu_custom_call.1} parent=0 // pred_region
    _
  $region41: #{tpu_custom_call.1} parent=0 // pred_fallthru
    _
  // Predicated region
  $region42: #{tpu_custom_call.1} parent=0 // pred_check
    _
  $region43: #{tpu_custom_call.1} parent=0 // pred_check_branch
    %39 = sbr.rel (0) target = $region45
  $region44: #{tpu_custom_call.1} parent=0 // pred_region
    _
  $region45: #{tpu_custom_call.1} parent=0 // pred_fallthru
    _
  // Predicated region
  $region46: #{tpu_custom_call.1} parent=0 // pred_check
    _
  $region47: #{tpu_custom_call.1} parent=0 // pred_check_branch
    %41 = sbr.rel (0) target = $region49
  $region48: #{tpu_custom_call.1} parent=0 // pred_region
    _
  $region49: #{tpu_custom_call.1} parent=0 // pred_fallthru
    _
  // Predicated region
  $region50: #{tpu_custom_call.1} parent=0 // pred_check
    _
  $region51: #{tpu_custom_call.1} parent=0 // pred_check_branch
    %43 = sbr.rel (0) target = $region53
  $region52: #{tpu_custom_call.1} parent=0 // pred_region
    _
  $region53: #{tpu_custom_call.1} parent=0 // pred_fallthru
    _
  %v44 = vld [vmem:[%s0] sm:$0xff]
  %v45 = vld [vmem:[%s1] sm:$0xff]
  %v46 = vld [vmem:[%s1 + $0x8] sm:$0xff]
  %v47 = vld [vmem:[%s2] sm:$0x1]
  %v49 = vperm.slane %v47, 0
  %vm51 = vcmask 130048
  %v53 = vsel %vm51, %v44, 0
  %55 = vmatpush.msra.mxu0 0.0
  %56 = vmatpush.msra.mxu0 0.0
  %57 = vmatpush.msra.mxu0 0.0
  %58 = vmatpush.msra.mxu0 0.0
  %59 = vmatpush.msra.mxu0 0.0
  %60 = vmatpush.msra.mxu0 0.0
  %61 = vmatpush.msra.mxu0 0.0
  %62 = vmatpush.msra.mxu0 0.0
  %63 = vmatpush.msra.mxu0 0.0
  %64 = vmatpush.msra.mxu0 0.0
  %65 = vmatpush.msra.mxu0 0.0
  %66 = vmatpush.msra.mxu0 0.0
  %67 = vmatpush.msra.mxu0 0.0
  %68 = vmatpush.msra.mxu0 0.0
  %69 = vmatpush.msra.mxu0 %v46
  %70 = vmatpush.msra.mxu0 %v45
  %71 = vmatmul.f32.gmra.mxu0 %v53
  %v72 = vpop.f32.mrf.mxu0
  %v73 = vadd.f32 %v49, %v72
  %74 = vdwg.mxu0
  %v75 = vmax.f32 %v73, 0.0
  %v76 = vmin.f32 %v75, 1.0
  %v77 = vmul.f32 %v76, 0.99
  %v78 = vmul.f32 %v73, 0.01
  %v79 = vadd.f32 %v77, %v78
  %v80 = vld [vmem:[%s3] sm:$0xff]
  %v81 = vld [vmem:[%s3 + $0x8] sm:$0xff]
  %v82 = vld [vmem:[%s3 + $0x10] sm:$0xff]
  %v83 = vld [vmem:[%s3 + $0x18] sm:$0xff]
  %v84 = vld [vmem:[%s3 + $0x20] sm:$0xff]
  %v85 = vld [vmem:[%s3 + $0x28] sm:$0xff]
  %v86 = vld [vmem:[%s3 + $0x30] sm:$0xff]
  %v87 = vld [vmem:[%s3 + $0x38] sm:$0xff]
  %v88 = vld [vmem:[%s4] sm:$0x1]
  %v90 = vperm.slane %v88, 0
  %vm92 = vcmask 523264
  %v94 = vsel %vm92, %v79, 0
  %96 = vmatpush.msra.mxu0 0.0
  %97 = vmatpush.msra.mxu0 0.0
  %98 = vmatpush.msra.mxu0 0.0
  %99 = vmatpush.msra.mxu0 0.0
  %100 = vmatpush.msra.mxu0 0.0
  %101 = vmatpush.msra.mxu0 0.0
  %102 = vmatpush.msra.mxu0 0.0
  %103 = vmatpush.msra.mxu0 0.0
  %104 = vmatpush.msra.mxu0 %v87
  %105 = vmatpush.msra.mxu0 %v86
  %106 = vmatpush.msra.mxu0 %v85
  %107 = vmatpush.msra.mxu0 %v84
  %108 = vmatpush.msra.mxu0 %v83
  %109 = vmatpush.msra.mxu0 %v82
  %110 = vmatpush.msra.mxu0 %v81
  %111 = vmatpush.msra.mxu0 %v80
  %112 = vmatmul.f32.gmra.mxu0 %v94
  %v113 = vpop.f32.mrf.mxu0
  %v114 = vadd.f32 %v90, %v113
  %115 = vdwg.mxu0
  %v116 = vmax.f32 %v114, 0.0
  %v117 = vmin.f32 %v116, 1.0
  %v118 = vmul.f32 %v117, 0.99
  %v119 = vmul.f32 %v114, 0.01
  %v120 = vadd.f32 %v118, %v119
  %v121 = vld [vmem:[%s5] sm:$0xff]
  %v122 = vld [vmem:[%s5 + $0x8] sm:$0xff]
  %v123 = vld [vmem:[%s5 + $0x10] sm:$0xff]
  %v124 = vld [vmem:[%s5 + $0x18] sm:$0xff]
  %v125 = vld [vmem:[%s5 + $0x20] sm:$0xff]
  %v126 = vld [vmem:[%s5 + $0x28] sm:$0xff]
  %v127 = vld [vmem:[%s5 + $0x30] sm:$0xff]
  %v128 = vld [vmem:[%s5 + $0x38] sm:$0xff]
  %v129 = vld [vmem:[%s6] sm:$0x1]
  %v131 = vperm.slane %v129, 0
  %v134 = vsel %vm92, %v120, 0
  %136 = vmatpush.msra.mxu0 0.0
  %137 = vmatpush.msra.mxu0 0.0
  %138 = vmatpush.msra.mxu0 0.0
  %139 = vmatpush.msra.mxu0 0.0
  %140 = vmatpush.msra.mxu0 0.0
  %141 = vmatpush.msra.mxu0 0.0
  %142 = vmatpush.msra.mxu0 0.0
  %143 = vmatpush.msra.mxu0 0.0
  %144 = vmatpush.msra.mxu0 %v128
  %145 = vmatpush.msra.mxu0 %v127
  %146 = vmatpush.msra.mxu0 %v126
  %147 = vmatpush.msra.mxu0 %v125
  %148 = vmatpush.msra.mxu0 %v124
  %149 = vmatpush.msra.mxu0 %v123
  %150 = vmatpush.msra.mxu0 %v122
  %151 = vmatpush.msra.mxu0 %v121
  %152 = vmatmul.f32.gmra.mxu0 %v134
  %v153 = vpop.f32.mrf.mxu0
  %v154 = vadd.f32 %v131, %v153
  %155 = vdwg.mxu0
  %v156 = vld [vmem:[%s7] sm:$0xff]
  %v157 = vld [vmem:[%s7 + $0x8] sm:$0xff]
  %v158 = vld [vmem:[%s7 + $0x10] sm:$0xff]
  %v159 = vld [vmem:[%s7 + $0x18] sm:$0xff]
  %v160 = vld [vmem:[%s7 + $0x20] sm:$0xff]
  %v161 = vld [vmem:[%s7 + $0x28] sm:$0xff]
  %v162 = vld [vmem:[%s7 + $0x30] sm:$0xff]
  %v163 = vld [vmem:[%s7 + $0x38] sm:$0xff]
  %v164 = vld [vmem:[%s8] sm:$0x1]
  %v166 = vperm.slane %v164, 0
  %168 = vmatpush.msra.mxu0 0.0
  %169 = vmatpush.msra.mxu0 0.0
  %170 = vmatpush.msra.mxu0 0.0
  %171 = vmatpush.msra.mxu0 0.0
  %172 = vmatpush.msra.mxu0 0.0
  %173 = vmatpush.msra.mxu0 0.0
  %174 = vmatpush.msra.mxu0 0.0
  %175 = vmatpush.msra.mxu0 0.0
  %176 = vmatpush.msra.mxu0 %v163
  %177 = vmatpush.msra.mxu0 %v162
  %178 = vmatpush.msra.mxu0 %v161
  %179 = vmatpush.msra.mxu0 %v160
  %180 = vmatpush.msra.mxu0 %v159
  %181 = vmatpush.msra.mxu0 %v158
  %182 = vmatpush.msra.mxu0 %v157
  %183 = vmatpush.msra.mxu0 %v156
  %184 = vmatmul.f32.gmra.mxu0 %v134
  %v185 = vpop.f32.mrf.mxu0
  %v186 = vadd.f32 %v166, %v185
  %187 = vdwg.mxu0
  %v188 = vmax.f32 %v186, 0.0
  %v189 = vmin.f32 %v188, 1.0
  %v190 = vmul.f32 %v189, 0.99
  %v191 = vmul.f32 %v186, 0.01
  %v192 = vadd.f32 %v190, %v191
  %v193 = vld [vmem:[%s9] sm:$0xff]
  %v194 = vld [vmem:[%s9 + $0x8] sm:$0xff]
  %v195 = vld [vmem:[%s9 + $0x10] sm:$0xff]
  %v196 = vld [vmem:[%s9 + $0x18] sm:$0xff]
  %v197 = vld [vmem:[%s10] sm:$0x1]
  %v199 = vperm.slane %v197, 0
  %vm201 = vcmask 261120
  %v203 = vsel %vm201, %v192, 0
  %205 = vmatpush.msra.mxu0 0.0
  %206 = vmatpush.msra.mxu0 0.0
  %207 = vmatpush.msra.mxu0 0.0
  %208 = vmatpush.msra.mxu0 0.0
  %209 = vmatpush.msra.mxu0 0.0
  %210 = vmatpush.msra.mxu0 0.0
  %211 = vmatpush.msra.mxu0 0.0
  %212 = vmatpush.msra.mxu0 0.0
  %213 = vmatpush.msra.mxu0 0.0
  %214 = vmatpush.msra.mxu0 0.0
  %215 = vmatpush.msra.mxu0 0.0
  %216 = vmatpush.msra.mxu0 0.0
  %217 = vmatpush.msra.mxu0 %v196
  %218 = vmatpush.msra.mxu0 %v195
  %219 = vmatpush.msra.mxu0 %v194
  %220 = vmatpush.msra.mxu0 %v193
  %221 = vmatmul.f32.gmra.mxu0 %v203
  %v222 = vpop.f32.mrf.mxu0
  %v223 = vadd.f32 %v199, %v222
  %224 = vdwg.mxu0
  %v225 = vmax.f32 %v223, 0.0
  %v226 = vmin.f32 %v225, 1.0
  %v227 = vmul.f32 %v226, 0.99
  %v228 = vmul.f32 %v223, 0.01
  %v229 = vadd.f32 %v227, %v228
  %v230 = vld [vmem:[%s11] sm:$0xff]
  %v231 = vld [vmem:[%s11 + $0x8] sm:$0xff]
  %v232 = vld [vmem:[%s11 + $0x10] sm:$0xff]
  %v233 = vld [vmem:[%s11 + $0x18] sm:$0xff]
  %v234 = vld [vmem:[%s12] sm:$0x1]
  %v236 = vperm.slane %v234, 0
  %v239 = vsel %vm201, %v229, 0
  %241 = vmatpush.msra.mxu0 0.0
  %242 = vmatpush.msra.mxu0 0.0
  %243 = vmatpush.msra.mxu0 0.0
  %244 = vmatpush.msra.mxu0 0.0
  %245 = vmatpush.msra.mxu0 0.0
  %246 = vmatpush.msra.mxu0 0.0
  %247 = vmatpush.msra.mxu0 0.0
  %248 = vmatpush.msra.mxu0 0.0
  %249 = vmatpush.msra.mxu0 0.0
  %250 = vmatpush.msra.mxu0 0.0
  %251 = vmatpush.msra.mxu0 0.0
  %252 = vmatpush.msra.mxu0 0.0
  %253 = vmatpush.msra.mxu0 %v233
  %254 = vmatpush.msra.mxu0 %v232
  %255 = vmatpush.msra.mxu0 %v231
  %256 = vmatpush.msra.mxu0 %v230
  %257 = vmatmul.f32.gmra.mxu0 %v239
  %v258 = vpop.f32.mrf.mxu0
  %v259 = vadd.f32 %v236, %v258
  %260 = vdwg.mxu0
  %v261 = vadd.f32 %v154, %v259
  %vm262 = vcmask 31744
  %263 = vst.msk [vmem:[%s13] sm:$0xff] %vm262, %v261
  // Predicated region
  $region54: #{tpu_custom_call.1} parent=0 // pred_check
    _
  $region55: #{tpu_custom_call.1} parent=0 // pred_check_branch
    %265 = sbr.rel (0) target = $region57
  $region56: #{tpu_custom_call.1} parent=0 // pred_region
    _
  $region57: #{tpu_custom_call.1} parent=0 // pred_fallthru
    _
  // Predicated region
  $region58: #{tpu_custom_call.1} parent=0 // pred_check
    _
  $region59: #{tpu_custom_call.1} parent=0 // pred_check_branch
    %267 = sbr.rel (0) target = $region61
  $region60: #{tpu_custom_call.1} parent=0 // pred_region
    _
  $region61: #{tpu_custom_call.1} parent=0 // pred_fallthru
    _

</llo_original>
